<compile_context>
chip_gen: v5e
topology: v5e:2x2
jax: 0.10.0
libtpu: 0.0.40
codegen_flags: <defaults>
</compile_context>

<pallas_src>
import jax
import jax.numpy as jnp
from jax.experimental import pallas as pl
from jax.experimental.pallas import tpu as pltpu


def _round_up(n: int, m: int) -> int:
    return ((n + m - 1) // m) * m


def _vmem_limit_bytes() -> int:
    # ~3/4 of physical VMEM (64 MiB on v7x, 128 MiB on v5e/v6e), well above the
    # 16/32 MiB scoped defaults, with headroom for Mosaic internals.
    try:
        cap = pltpu.get_tpu_info().vmem_capacity_bytes
    except Exception:
        cap = 64 * 1024 * 1024
    return int(cap) * 3 // 4


def _mlp_kernel(x_ref, w1_ref, b1_ref, w2_ref, b2_ref, o_ref):
    # f32 -> bf16 cast in-kernel: free VPU filler under an MXU-bound regime and
    # avoids materializing a second copy of x in HBM.
    x = x_ref[...].astype(w1_ref.dtype)
    # fc1 on the MXU: bf16 operands, f32 accumulation.
    h = jnp.dot(x, w1_ref[...], preferred_element_type=jnp.float32)
    # Bias + ReLU in f32 on the VPU (exact; also the fast path on v5e).
    h = jnp.maximum(h + b1_ref[...], 0.0)
    # fc2 on the MXU.
    y = jnp.dot(h.astype(w2_ref.dtype), w2_ref[...],
                preferred_element_type=jnp.float32)
    o_ref[...] = (y + b2_ref[...]).astype(o_ref.dtype)


def prepare_params(w1, b1, w2, b2):
    """One-time parameter prep (analogue of nn.Module.__init__).

    w1: [I, H], b1: [H], w2: [H, O], b2: [O]  (weights already transposed to
    [in, out]).  Pads the hidden dim to a multiple of 128 (lane-dense hidden
    intermediate; padded columns/rows contribute exactly 0) and casts matmul
    operands to bf16.  I and O are left unpadded: their blocks are full-dim.
    """
    I, H = w1.shape
    H2, O = w2.shape
    assert H2 == H and b1.shape == (H,) and b2.shape == (O,)
    HP = _round_up(H, 128)
    bf16, f32 = jnp.bfloat16, jnp.float32
    w1_p = jnp.zeros((I, HP), bf16).at[:, :H].set(w1.astype(bf16))
    b1_p = jnp.zeros((1, HP), f32).at[0, :H].set(b1.astype(f32))
    w2_p = jnp.zeros((HP, O), bf16).at[:H, :].set(w2.astype(bf16))
    b2_p = b2.astype(f32).reshape(1, O)
    return {"w1": w1_p, "b1": b1_p, "w2": w2_p, "b2": b2_p,
            "in_features": I, "hidden": H, "out_features": O}


def one_hidden_layer_mlp(x, params, *, batch_tile=256):
    """x: [B, I] -> [B, O] using pre-prepared (padded, bf16) parameters."""
    B, I = x.shape
    assert I == params["in_features"], "input feature mismatch"
    w1_p, b1_p = params["w1"], params["b1"]
    w2_p, b2_p = params["w2"], params["b2"]
    HP = w1_p.shape[1]
    O = w2_p.shape[1]

    # Batch tile: multiple of 8 (sublane constraint on the x/out blocks),
    # default 256 (fills a v6e/v7x 256x256 MXU pass).
    B8 = _round_up(B, 8)
    TB = _round_up(min(max(int(batch_tile), 8), B8), 8)
    # v7x has two TensorCores sharing the "parallel" batch axis: force >= 2 grid
    # steps whenever the batch is big enough to split.
    if B8 > 8 and B8 <= TB:
        TB = _round_up(-(-B8 // 2), 8)
    BP = _round_up(B8, TB)
    grid = (BP // TB,)

    # Pad x only along batch (last dim stays = I, a full-dim block), keep f32.
    x_p = x if BP == B else jnp.zeros((BP, I), x.dtype).at[:B].set(x)

    cost = pl.CostEstimate(
        flops=2 * BP * I * HP + 2 * BP * HP * O,
        transcendentals=0,
        bytes_accessed=(BP * I * x.dtype.itemsize
                        + I * HP * 2 + HP * O * 2      # bf16 weights
                        + HP * 4 + O * 4               # f32 biases
                        + BP * O * x.dtype.itemsize),  # output
    )
    cparams = pltpu.CompilerParams(
        dimension_semantics=("parallel",),
        vmem_limit_bytes=_vmem_limit_bytes(),
    )

    def _build(single_buffer_weights):
        # Weights/biases use constant index_maps (fetched once, VMEM-resident);
        # single-buffering them halves their VMEM footprint.
        res = dict(pipeline_mode=pl.Buffered(1)) if single_buffer_weights else {}
        in_specs = [
            pl.BlockSpec((TB, I), lambda i: (i, 0)),          # x: batch-tiled
            pl.BlockSpec((I, HP), lambda i: (0, 0), **res),   # w1: resident
            pl.BlockSpec((1, HP), lambda i: (0, 0), **res),   # b1: resident
            pl.BlockSpec((HP, O), lambda i: (0, 0), **res),   # w2: resident
            pl.BlockSpec((1, O), lambda i: (0, 0), **res),    # b2: resident
        ]
        return pl.pallas_call(
            _mlp_kernel,
            out_shape=jax.ShapeDtypeStruct((BP, O), x.dtype),
            grid=grid,
            in_specs=in_specs,
            out_specs=pl.BlockSpec((TB, O), lambda i: (i, 0)),
            compiler_params=cparams,
            cost_estimate=cost,
        )

    try:
        out_p = _build(True)(x_p, w1_p, b1_p, w2_p, b2_p)
    except Exception:
        # Fallback if this Pallas build rejects single-buffered block specs.
        out_p = _build(False)(x_p, w1_p, b1_p, w2_p, b2_p)

    # Note: padded batch rows of out_p contain garbage (ReLU(b1) @ w2 + b2);
    # they are sliced away here and must never be consumed directly.
    return out_p if BP == B else out_p[:B]


if __name__ == "__main__":
    # Shapes implied by the module: Linear(input_size, hidden_size), Linear(hidden_size, 1)
    batch, input_size, hidden_size, output_size = 8, 16, 32, 1

    key = jax.random.PRNGKey(0)
    kx, kw1, kb1, kw2, kb2 = jax.random.split(key, 5)

    x = jax.random.normal(kx, (batch, input_size), dtype=jnp.float32)

    # Deterministic parameter init (uniform, like torch's default range),
    # stored as [in, out] (torch weight transposed).
    lim1 = 1.0 / (input_size ** 0.5)
    lim2 = 1.0 / (hidden_size ** 0.5)
    w1 = jax.random.uniform(kw1, (input_size, hidden_size), jnp.float32, -lim1, lim1)
    b1 = jax.random.uniform(kb1, (hidden_size,), jnp.float32, -lim1, lim1)
    w2 = jax.random.uniform(kw2, (hidden_size, output_size), jnp.float32, -lim2, lim2)
    b2 = jax.random.uniform(kb2, (output_size,), jnp.float32, -lim2, lim2)

    # One-time parameter prep (the __init__ analogue), then the forward pass.
    params = prepare_params(w1, b1, w2, b2)
    out = one_hidden_layer_mlp(x, params)
    out = jax.block_until_ready(out)
    assert out.shape == (batch, output_size)

    # Pure-JAX f32 reference (same math as the PyTorch forward).  Tolerance is
    # loosened because the kernel uses bf16 matmul operands (f32 accumulation).
    ref_f32 = jnp.maximum(x @ w1 + b1, 0.0) @ w2 + b2
    assert jnp.allclose(out, ref_f32, atol=5e-2, rtol=5e-2), (out, ref_f32)

    # Tighter check against a bf16-operand reference (matches kernel numerics).
    h_ref = jnp.maximum(
        jnp.dot(x.astype(jnp.bfloat16), w1.astype(jnp.bfloat16),
                preferred_element_type=jnp.float32) + b1, 0.0)
    ref_bf16 = jnp.dot(h_ref.astype(jnp.bfloat16), w2.astype(jnp.bfloat16),
                       preferred_element_type=jnp.float32) + b2
    assert jnp.allclose(out, ref_bf16, atol=2e-5, rtol=2e-5), (out, ref_bf16)

    print("KERNEL_OK")
</pallas_src>

<mosaic_0001>
module attributes {stable_mosaic.version = 11 : i64} {
  func.func @_mlp_kernel(%arg0: i32, %arg1: memref<8x16xf32, #tpu.memory_space<vmem>>, %arg2: memref<16x128xbf16, #tpu.memory_space<vmem>>, %arg3: memref<1x128xf32, #tpu.memory_space<vmem>>, %arg4: memref<128x1xbf16, #tpu.memory_space<vmem>>, %arg5: memref<1x1xf32, #tpu.memory_space<vmem>>, %arg6: memref<8x1xf32, #tpu.memory_space<vmem>>) attributes {dimension_semantics = [#tpu.dimension_semantics<parallel>], iteration_bounds = array<i64: 1>, scalar_prefetch = 0 : i64, scratch_operands = 0 : i64, tpu.core_type = #tpu.core_type<tc>, window_params = [{transform_indices = @transform_0, window_bounds = array<i64: 8, 16>}, {pipeline_mode = #tpu.pipeline_mode<synchronous>, transform_indices = @transform_1, window_bounds = array<i64: 16, 128>}, {pipeline_mode = #tpu.pipeline_mode<synchronous>, transform_indices = @transform_2, window_bounds = array<i64: 1, 128>}, {pipeline_mode = #tpu.pipeline_mode<synchronous>, transform_indices = @transform_3, window_bounds = array<i64: 128, 1>}, {pipeline_mode = #tpu.pipeline_mode<synchronous>, transform_indices = @transform_4, window_bounds = array<i64: 1, 1>}, {transform_indices = @transform_5, window_bounds = array<i64: 8, 1>}]} {
    %c0 = arith.constant 0 : index
    %c0_0 = arith.constant 0 : index
    %0 = vector.load %arg1[%c0, %c0_0] : memref<8x16xf32, #tpu.memory_space<vmem>>, vector<8x16xf32>
    %1 = arith.truncf %0 : vector<8x16xf32> to vector<8x16xbf16>
    %c0_1 = arith.constant 0 : index
    %c0_2 = arith.constant 0 : index
    %2 = vector.load %arg2[%c0_1, %c0_2] : memref<16x128xbf16, #tpu.memory_space<vmem>>, vector<16x128xbf16>
    %cst = arith.constant dense<0.000000e+00> : vector<8x128xf32>
    %3 = tpu.matmul %1, %2, %cst {dimension_numbers = #tpu.dot_dimension_numbers<[1], [0], [0], [1], [0, 0, 1, 1], [], []>} : vector<8x16xbf16>, vector<16x128xbf16>, vector<8x128xf32> -> vector<8x128xf32>
    %c0_3 = arith.constant 0 : index
    %c0_4 = arith.constant 0 : index
    %4 = vector.load %arg3[%c0_3, %c0_4] : memref<1x128xf32, #tpu.memory_space<vmem>>, vector<1x128xf32>
    %5 = vector.broadcast %4 : vector<1x128xf32> to vector<8x128xf32>
    %6 = arith.addf %3, %5 : vector<8x128xf32>
    %cst_5 = arith.constant 0.000000e+00 : f32
    %7 = vector.broadcast %cst_5 : f32 to vector<8x128xf32>
    %8 = arith.maximumf %6, %7 : vector<8x128xf32>
    %9 = arith.truncf %8 : vector<8x128xf32> to vector<8x128xbf16>
    %c0_6 = arith.constant 0 : index
    %c0_7 = arith.constant 0 : index
    %10 = vector.load %arg4[%c0_6, %c0_7] : memref<128x1xbf16, #tpu.memory_space<vmem>>, vector<128x1xbf16>
    %cst_8 = arith.constant dense<0.000000e+00> : vector<8x1xf32>
    %11 = tpu.matmul %9, %10, %cst_8 {dimension_numbers = #tpu.dot_dimension_numbers<[1], [0], [0], [1], [0, 0, 1, 1], [], []>} : vector<8x128xbf16>, vector<128x1xbf16>, vector<8x1xf32> -> vector<8x1xf32>
    %c0_9 = arith.constant 0 : index
    %c0_10 = arith.constant 0 : index
    %12 = vector.load %arg5[%c0_9, %c0_10] : memref<1x1xf32, #tpu.memory_space<vmem>>, vector<1x1xf32>
    %13 = vector.broadcast %12 : vector<1x1xf32> to vector<8x1xf32>
    %14 = arith.addf %11, %13 : vector<8x1xf32>
    %c0_11 = arith.constant 0 : index
    %c0_12 = arith.constant 0 : index
    %15 = vector.load %arg6[%c0_11, %c0_12] : memref<8x1xf32, #tpu.memory_space<vmem>>, vector<8x1xf32>
    tpu.vector_store %arg6[%c0_11, %c0_12], %14 {strides = array<i32>} : memref<8x1xf32, #tpu.memory_space<vmem>>, vector<8x1xf32>,
    return
  }
  func.func @transform_0(%arg0: i32) -> (i32, i32) {
    %c0_i32 = arith.constant 0 : i32
    %c0_i32_0 = arith.constant 0 : i32
    return %arg0, %c0_i32 : i32, i32
  }
  func.func @transform_1(%arg0: i32) -> (i32, i32) {
    %c0_i32 = arith.constant 0 : i32
    %c0_i32_0 = arith.constant 0 : i32
    %c0_i32_1 = arith.constant 0 : i32
    return %c0_i32, %c0_i32_0 : i32, i32
  }
  func.func @transform_2(%arg0: i32) -> (i32, i32) {
    %c0_i32 = arith.constant 0 : i32
    %c0_i32_0 = arith.constant 0 : i32
    %c0_i32_1 = arith.constant 0 : i32
    return %c0_i32, %c0_i32_0 : i32, i32
  }
  func.func @transform_3(%arg0: i32) -> (i32, i32) {
    %c0_i32 = arith.constant 0 : i32
    %c0_i32_0 = arith.constant 0 : i32
    %c0_i32_1 = arith.constant 0 : i32
    return %c0_i32, %c0_i32_0 : i32, i32
  }
  func.func @transform_4(%arg0: i32) -> (i32, i32) {
    %c0_i32 = arith.constant 0 : i32
    %c0_i32_0 = arith.constant 0 : i32
    %c0_i32_1 = arith.constant 0 : i32
    return %c0_i32, %c0_i32_0 : i32, i32
  }
  func.func @transform_5(%arg0: i32) -> (i32, i32) {
    %c0_i32 = arith.constant 0 : i32
    %c0_i32_0 = arith.constant 0 : i32
    return %arg0, %c0_i32 : i32, i32
  }
}

module attributes {stable_mosaic.version = 11 : i64} {
  func.func @_mlp_kernel(%arg0: i32, %arg1: memref<8x16xf32, #tpu.memory_space<vmem>>, %arg2: memref<16x128xbf16, #tpu.memory_space<vmem>>, %arg3: memref<1x128xf32, #tpu.memory_space<vmem>>, %arg4: memref<128x1xbf16, #tpu.memory_space<vmem>>, %arg5: memref<1x1xf32, #tpu.memory_space<vmem>>, %arg6: memref<8x1xf32, #tpu.memory_space<vmem>>) attributes {dimension_semantics = [#tpu.dimension_semantics<parallel>], iteration_bounds = array<i64: 1>, scalar_prefetch = 0 : i64, scratch_operands = 0 : i64, tpu.core_type = #tpu.core_type<tc>, window_params = [{transform_indices = @transform_0, window_bounds = array<i64: 8, 16>}, {pipeline_mode = #tpu.pipeline_mode<synchronous>, transform_indices = @transform_1, window_bounds = array<i64: 16, 128>}, {pipeline_mode = #tpu.pipeline_mode<synchronous>, transform_indices = @transform_2, window_bounds = array<i64: 1, 128>}, {pipeline_mode = #tpu.pipeline_mode<synchronous>, transform_indices = @transform_3, window_bounds = array<i64: 128, 1>}, {pipeline_mode = #tpu.pipeline_mode<synchronous>, transform_indices = @transform_4, window_bounds = array<i64: 1, 1>}, {transform_indices = @transform_5, window_bounds = array<i64: 8, 1>}]} {
    %c0 = arith.constant 0 : index
    %c0_0 = arith.constant 0 : index
    %0 = vector.load %arg1[%c0, %c0_0] : memref<8x16xf32, #tpu.memory_space<vmem>>, vector<8x16xf32>
    %1 = arith.truncf %0 : vector<8x16xf32> to vector<8x16xbf16>
    %c0_1 = arith.constant 0 : index
    %c0_2 = arith.constant 0 : index
    %2 = vector.load %arg2[%c0_1, %c0_2] : memref<16x128xbf16, #tpu.memory_space<vmem>>, vector<16x128xbf16>
    %cst = arith.constant dense<0.000000e+00> : vector<8x128xf32>
    %3 = tpu.matmul %1, %2, %cst {dimension_numbers = #tpu.dot_dimension_numbers<[1], [0], [0], [1], [0, 0, 1, 1], [], []>} : vector<8x16xbf16>, vector<16x128xbf16>, vector<8x128xf32> -> vector<8x128xf32>
    %c0_3 = arith.constant 0 : index
    %c0_4 = arith.constant 0 : index
    %4 = vector.load %arg3[%c0_3, %c0_4] : memref<1x128xf32, #tpu.memory_space<vmem>>, vector<1x128xf32>
    %5 = vector.broadcast %4 : vector<1x128xf32> to vector<8x128xf32>
    %6 = arith.addf %3, %5 : vector<8x128xf32>
    %cst_5 = arith.constant 0.000000e+00 : f32
    %7 = vector.broadcast %cst_5 : f32 to vector<8x128xf32>
    %8 = arith.maximumf %6, %7 : vector<8x128xf32>
    %9 = arith.truncf %8 : vector<8x128xf32> to vector<8x128xbf16>
    %c0_6 = arith.constant 0 : index
    %c0_7 = arith.constant 0 : index
    %10 = vector.load %arg4[%c0_6, %c0_7] : memref<128x1xbf16, #tpu.memory_space<vmem>>, vector<128x1xbf16>
    %cst_8 = arith.constant dense<0.000000e+00> : vector<8x1xf32>
    %11 = tpu.matmul %9, %10, %cst_8 {dimension_numbers = #tpu.dot_dimension_numbers<[1], [0], [0], [1], [0, 0, 1, 1], [], []>} : vector<8x128xbf16>, vector<128x1xbf16>, vector<8x1xf32> -> vector<8x1xf32>
    %c0_9 = arith.constant 0 : index
    %c0_10 = arith.constant 0 : index
    %12 = vector.load %arg5[%c0_9, %c0_10] : memref<1x1xf32, #tpu.memory_space<vmem>>, vector<1x1xf32>
    %13 = vector.broadcast %12 : vector<1x1xf32> to vector<8x1xf32>
    %14 = arith.addf %11, %13 : vector<8x1xf32>
    %c0_11 = arith.constant 0 : index
    %c0_12 = arith.constant 0 : index
    %15 = vector.load %arg6[%c0_11, %c0_12] : memref<8x1xf32, #tpu.memory_space<vmem>>, vector<8x1xf32>
    tpu.vector_store %arg6[%c0_11, %c0_12], %14 {strides = array<i32>} : memref<8x1xf32, #tpu.memory_space<vmem>>, vector<8x1xf32>,
    return
  }
  func.func @transform_0(%arg0: i32) -> (i32, i32) {
    %c0_i32 = arith.constant 0 : i32
    %c0_i32_0 = arith.constant 0 : i32
    return %arg0, %c0_i32 : i32, i32
  }
  func.func @transform_1(%arg0: i32) -> (i32, i32) {
    %c0_i32 = arith.constant 0 : i32
    %c0_i32_0 = arith.constant 0 : i32
    %c0_i32_1 = arith.constant 0 : i32
    return %c0_i32, %c0_i32_0 : i32, i32
  }
  func.func @transform_2(%arg0: i32) -> (i32, i32) {
    %c0_i32 = arith.constant 0 : i32
    %c0_i32_0 = arith.constant 0 : i32
    %c0_i32_1 = arith.constant 0 : i32
    return %c0_i32, %c0_i32_0 : i32, i32
  }
  func.func @transform_3(%arg0: i32) -> (i32, i32) {
    %c0_i32 = arith.constant 0 : i32
    %c0_i32_0 = arith.constant 0 : i32
    %c0_i32_1 = arith.constant 0 : i32
    return %c0_i32, %c0_i32_0 : i32, i32
  }
  func.func @transform_4(%arg0: i32) -> (i32, i32) {
    %c0_i32 = arith.constant 0 : i32
    %c0_i32_0 = arith.constant 0 : i32
    %c0_i32_1 = arith.constant 0 : i32
    return %c0_i32, %c0_i32_0 : i32, i32
  }
  func.func @transform_5(%arg0: i32) -> (i32, i32) {
    %c0_i32 = arith.constant 0 : i32
    %c0_i32_0 = arith.constant 0 : i32
    return %arg0, %c0_i32 : i32, i32
  }
}

</mosaic_0001>

<llo_original>
// kernel: tpu_custom_call.1
$region0: #{tpu_custom_call.1}
  #allocation0 [shape = 'u32[]', space=smem, size = 0x4, offset = 0x4, fixed_abs, tag = 'smem constant byte address 0x4 - core index']
  #allocation1 [shape = 'u32[72,128]{1,0:T(1,128)}', space=vmem, size = 0x9000, scoped, tag = 'internal scratch']
  #allocation2 [shape = 'f32[1,1]{1,0:T(1,128)S(1)}', space=vmem, size = 0x200, scoped, tag = 'scoped memory for tpu_custom_call.1']
  %s0 = inlined_call_operand.vmem [shape: f32[8,16], index: 0, kind: input, shape index: {}]
  %s1 = inlined_call_operand.vmem [shape: bf16[16,128], index: 1, kind: input, shape index: {}]
  %s2 = inlined_call_operand.vmem [shape: f32[1,128], index: 2, kind: input, shape index: {}]
  %s3 = inlined_call_operand.vmem [shape: bf16[128,1], index: 3, kind: input, shape index: {}]
  %s4 = inlined_call_operand.<no memory space> [shape: f32[1,1], index: 4, kind: input, shape index: {}]
  %s5 = inlined_call_operand.vmem [shape: f32[8,1], index: 5, kind: output, shape index: {}]
  %s6 = sld [smem:[#allocation0]]
  $region30: #{tpu_custom_call.1} parent=0
    _
  %s8 = ssub.s32 1, %s6
  %s9 = scalar_select 0, %s8, %s6
  %v10 = vstv %s4
  %11 = vst [vmem:[#allocation2] sm:$0x1] %v10
  // Predicated region
  $region2: #{tpu_custom_call.1} parent=0 // pred_check
    _
  $region3: #{tpu_custom_call.1} parent=0 // pred_check_branch
    %13 = sbr.rel (0) target = $region5
  $region4: #{tpu_custom_call.1} parent=0 // pred_region
    _
  $region5: #{tpu_custom_call.1} parent=0 // pred_fallthru
    _
  // Predicated region
  $region6: #{tpu_custom_call.1} parent=0 // pred_check
    _
  $region7: #{tpu_custom_call.1} parent=0 // pred_check_branch
    %15 = sbr.rel (0) target = $region9
  $region8: #{tpu_custom_call.1} parent=0 // pred_region
    _
  $region9: #{tpu_custom_call.1} parent=0 // pred_fallthru
    _
  // Predicated region
  $region10: #{tpu_custom_call.1} parent=0 // pred_check
    _
  $region11: #{tpu_custom_call.1} parent=0 // pred_check_branch
    %17 = sbr.rel (0) target = $region13
  $region12: #{tpu_custom_call.1} parent=0 // pred_region
    _
  $region13: #{tpu_custom_call.1} parent=0 // pred_fallthru
    _
  // Predicated region
  $region14: #{tpu_custom_call.1} parent=0 // pred_check
    _
  $region15: #{tpu_custom_call.1} parent=0 // pred_check_branch
    %19 = sbr.rel (0) target = $region17
  $region16: #{tpu_custom_call.1} parent=0 // pred_region
    _
  $region17: #{tpu_custom_call.1} parent=0 // pred_fallthru
    _
  // Predicated region
  $region18: #{tpu_custom_call.1} parent=0 // pred_check
    _
  $region19: #{tpu_custom_call.1} parent=0 // pred_check_branch
    %21 = sbr.rel (0) target = $region21
  $region20: #{tpu_custom_call.1} parent=0 // pred_region
    _
  $region21: #{tpu_custom_call.1} parent=0 // pred_fallthru
    _
  %v23 = vld [vmem:[%s0] sm:$0xff]
  %v24 = vpack.c.bf16 %v23, %v23
  %v25 = vld [vmem:[%s1] sm:$0xf]
  %v26 = vld [vmem:[%s1 + $0x4] sm:$0xf]
  %v27 = vld [vmem:[%s2] sm:$0x1]
  %v29 = vperm.slane %v27, 0
  %v33 = vunpack.c.l.b16 %v25
  %v34 = vunpack.c.l.b16 %v26
  %v35 = vpack.c.b16 %v34, %v33
  %vm37 = vcmask 130048
  %v39 = vsel %vm37, %v24, 0
  %41 = vmatpush.bf16.msra.mxu0 0
  %42 = vmatpush.bf16.msra.mxu0 0
  %43 = vmatpush.bf16.msra.mxu0 0
  %44 = vmatpush.bf16.msra.mxu0 0
  %45 = vmatpush.bf16.msra.mxu0 0
  %46 = vmatpush.bf16.msra.mxu0 0
  %47 = vmatpush.bf16.msra.mxu0 0
  %48 = vmatpush.bf16.msra.mxu0 %v35
  %49 = vmatmul.bf16.gmra.mxu0 %v39
  %v50 = vpop.f32.mrf.mxu0
  %v51 = vadd.f32 %v29, %v50
  %v52 = vpop.f32.mrf.mxu0
  %53 = vdwg.mxu0
  %v54 = vmax.f32 %v51, 0.0
  %v55 = vpack.c.bf16 %v54, %v54
  %v56 = vld [vmem:[%s3] sm:$0xf]
  %v57 = vld [vmem:[%s3 + $0x4] sm:$0xf]
  %v58 = vld [vmem:[%s3 + $0x8] sm:$0xf]
  %v59 = vld [vmem:[%s3 + $0xc] sm:$0xf]
  %v60 = vld [vmem:[%s3 + $0x10] sm:$0xf]
  %v61 = vld [vmem:[%s3 + $0x14] sm:$0xf]
  %v62 = vld [vmem:[%s3 + $0x18] sm:$0xf]
  %v63 = vld [vmem:[%s3 + $0x1c] sm:$0xf]
  %v64 = vld [vmem:[%s3 + $0x20] sm:$0xf]
  %v65 = vld [vmem:[%s3 + $0x24] sm:$0xf]
  %v66 = vld [vmem:[%s3 + $0x28] sm:$0xf]
  %v67 = vld [vmem:[%s3 + $0x2c] sm:$0xf]
  %v68 = vld [vmem:[%s3 + $0x30] sm:$0xf]
  %v69 = vld [vmem:[%s3 + $0x34] sm:$0xf]
  %v70 = vld [vmem:[%s3 + $0x38] sm:$0xf]
  %v71 = vld [vmem:[%s3 + $0x3c] sm:$0xf]
  %v72 = vld [vmem:[#allocation2] sm:$0x1]
  %v74 = vperm.slane %v72, 0
  %v92 = vunpack.c.l.b16 %v56
  %v93 = vunpack.c.l.b16 %v57
  %v94 = vunpack.c.l.b16 %v58
  %v95 = vunpack.c.l.b16 %v59
  %v96 = vunpack.c.l.b16 %v60
  %v97 = vunpack.c.l.b16 %v61
  %v98 = vunpack.c.l.b16 %v62
  %v99 = vunpack.c.l.b16 %v63
  %v100 = vunpack.c.l.b16 %v64
  %v101 = vunpack.c.l.b16 %v65
  %v102 = vunpack.c.l.b16 %v66
  %v103 = vunpack.c.l.b16 %v67
  %v104 = vunpack.c.l.b16 %v68
  %v105 = vunpack.c.l.b16 %v69
  %v106 = vunpack.c.l.b16 %v70
  %v107 = vunpack.c.l.b16 %v71
  %v108 = vpack.c.b16 %v93, %v92
  %v109 = vpack.c.b16 %v95, %v94
  %v110 = vpack.c.b16 %v97, %v96
  %v111 = vpack.c.b16 %v99, %v98
  %v112 = vpack.c.b16 %v101, %v100
  %v113 = vpack.c.b16 %v103, %v102
  %v114 = vpack.c.b16 %v105, %v104
  %v115 = vpack.c.b16 %v107, %v106
  %124 = vmatpush.bf16.msra.mxu0 %v115
  %125 = vmatpush.bf16.msra.mxu0 %v114
  %126 = vmatpush.bf16.msra.mxu0 %v113
  %127 = vmatpush.bf16.msra.mxu0 %v112
  %128 = vmatpush.bf16.msra.mxu0 %v111
  %129 = vmatpush.bf16.msra.mxu0 %v110
  %130 = vmatpush.bf16.msra.mxu0 %v109
  %131 = vmatpush.bf16.msra.mxu0 %v108
  %132 = vmatmul.bf16.gmra.mxu0 %v55
  %v133 = vpop.f32.mrf.mxu0
  %v134 = vadd.f32 %v74, %v133
  %v135 = vpop.f32.mrf.mxu0
  %136 = vdwg.mxu0
  %vm137 = vcmask 7168
  %138 = vst.msk [vmem:[%s5] sm:$0xff] %vm137, %v134
  // Predicated region
  $region22: #{tpu_custom_call.1} parent=0 // pred_check
    _
  $region23: #{tpu_custom_call.1} parent=0 // pred_check_branch
    %140 = sbr.rel (0) target = $region25
  $region24: #{tpu_custom_call.1} parent=0 // pred_region
    _
  $region25: #{tpu_custom_call.1} parent=0 // pred_fallthru
    _
  // Predicated region
  $region26: #{tpu_custom_call.1} parent=0 // pred_check
    _
  $region27: #{tpu_custom_call.1} parent=0 // pred_check_branch
    %142 = sbr.rel (0) target = $region29
  $region28: #{tpu_custom_call.1} parent=0 // pred_region
    _
  $region29: #{tpu_custom_call.1} parent=0 // pred_fallthru
    _

// kernel: tpu_custom_call.1
$region0: #{tpu_custom_call.1}
  #allocation0 [shape = 'u32[]', space=smem, size = 0x4, offset = 0x4, fixed_abs, tag = 'smem constant byte address 0x4 - core index']
  #allocation1 [shape = 'u32[72,128]{1,0:T(1,128)}', space=vmem, size = 0x9000, scoped, tag = 'internal scratch']
  #allocation2 [shape = 'f32[1,1]{1,0:T(1,128)S(1)}', space=vmem, size = 0x200, scoped, tag = 'scoped memory for tpu_custom_call.1']
  %s0 = inlined_call_operand.vmem [shape: f32[8,16], index: 0, kind: input, shape index: {}]
  %s1 = inlined_call_operand.vmem [shape: bf16[16,128], index: 1, kind: input, shape index: {}]
  %s2 = inlined_call_operand.vmem [shape: f32[1,128], index: 2, kind: input, shape index: {}]
  %s3 = inlined_call_operand.vmem [shape: bf16[128,1], index: 3, kind: input, shape index: {}]
  %s4 = inlined_call_operand.<no memory space> [shape: f32[1,1], index: 4, kind: input, shape index: {}]
  %s5 = inlined_call_operand.vmem [shape: f32[8,1], index: 5, kind: output, shape index: {}]
  %s6 = sld [smem:[#allocation0]]
  $region30: #{tpu_custom_call.1} parent=0
    _
  %s8 = ssub.s32 1, %s6
  %s9 = scalar_select 0, %s8, %s6
  %v10 = vstv %s4
  %11 = vst [vmem:[#allocation2] sm:$0x1] %v10
  // Predicated region
  $region2: #{tpu_custom_call.1} parent=0 // pred_check
    _
  $region3: #{tpu_custom_call.1} parent=0 // pred_check_branch
    %13 = sbr.rel (0) target = $region5
  $region4: #{tpu_custom_call.1} parent=0 // pred_region
    _
  $region5: #{tpu_custom_call.1} parent=0 // pred_fallthru
    _
  // Predicated region
  $region6: #{tpu_custom_call.1} parent=0 // pred_check
    _
  $region7: #{tpu_custom_call.1} parent=0 // pred_check_branch
    %15 = sbr.rel (0) target = $region9
  $region8: #{tpu_custom_call.1} parent=0 // pred_region
    _
  $region9: #{tpu_custom_call.1} parent=0 // pred_fallthru
    _
  // Predicated region
  $region10: #{tpu_custom_call.1} parent=0 // pred_check
    _
  $region11: #{tpu_custom_call.1} parent=0 // pred_check_branch
    %17 = sbr.rel (0) target = $region13
  $region12: #{tpu_custom_call.1} parent=0 // pred_region
    _
  $region13: #{tpu_custom_call.1} parent=0 // pred_fallthru
    _
  // Predicated region
  $region14: #{tpu_custom_call.1} parent=0 // pred_check
    _
  $region15: #{tpu_custom_call.1} parent=0 // pred_check_branch
    %19 = sbr.rel (0) target = $region17
  $region16: #{tpu_custom_call.1} parent=0 // pred_region
    _
  $region17: #{tpu_custom_call.1} parent=0 // pred_fallthru
    _
  // Predicated region
  $region18: #{tpu_custom_call.1} parent=0 // pred_check
    _
  $region19: #{tpu_custom_call.1} parent=0 // pred_check_branch
    %21 = sbr.rel (0) target = $region21
  $region20: #{tpu_custom_call.1} parent=0 // pred_region
    _
  $region21: #{tpu_custom_call.1} parent=0 // pred_fallthru
    _
  %v23 = vld [vmem:[%s0] sm:$0xff]
  %v24 = vpack.c.bf16 %v23, %v23
  %v25 = vld [vmem:[%s1] sm:$0xf]
  %v26 = vld [vmem:[%s1 + $0x4] sm:$0xf]
  %v27 = vld [vmem:[%s2] sm:$0x1]
  %v29 = vperm.slane %v27, 0
  %v33 = vunpack.c.l.b16 %v25
  %v34 = vunpack.c.l.b16 %v26
  %v35 = vpack.c.b16 %v34, %v33
  %vm37 = vcmask 130048
  %v39 = vsel %vm37, %v24, 0
  %41 = vmatpush.bf16.msra.mxu0 0
  %42 = vmatpush.bf16.msra.mxu0 0
  %43 = vmatpush.bf16.msra.mxu0 0
  %44 = vmatpush.bf16.msra.mxu0 0
  %45 = vmatpush.bf16.msra.mxu0 0
  %46 = vmatpush.bf16.msra.mxu0 0
  %47 = vmatpush.bf16.msra.mxu0 0
  %48 = vmatpush.bf16.msra.mxu0 %v35
  %49 = vmatmul.bf16.gmra.mxu0 %v39
  %v50 = vpop.f32.mrf.mxu0
  %v51 = vadd.f32 %v29, %v50
  %v52 = vpop.f32.mrf.mxu0
  %53 = vdwg.mxu0
  %v54 = vmax.f32 %v51, 0.0
  %v55 = vpack.c.bf16 %v54, %v54
  %v56 = vld [vmem:[%s3] sm:$0xf]
  %v57 = vld [vmem:[%s3 + $0x4] sm:$0xf]
  %v58 = vld [vmem:[%s3 + $0x8] sm:$0xf]
  %v59 = vld [vmem:[%s3 + $0xc] sm:$0xf]
  %v60 = vld [vmem:[%s3 + $0x10] sm:$0xf]
  %v61 = vld [vmem:[%s3 + $0x14] sm:$0xf]
  %v62 = vld [vmem:[%s3 + $0x18] sm:$0xf]
  %v63 = vld [vmem:[%s3 + $0x1c] sm:$0xf]
  %v64 = vld [vmem:[%s3 + $0x20] sm:$0xf]
  %v65 = vld [vmem:[%s3 + $0x24] sm:$0xf]
  %v66 = vld [vmem:[%s3 + $0x28] sm:$0xf]
  %v67 = vld [vmem:[%s3 + $0x2c] sm:$0xf]
  %v68 = vld [vmem:[%s3 + $0x30] sm:$0xf]
  %v69 = vld [vmem:[%s3 + $0x34] sm:$0xf]
  %v70 = vld [vmem:[%s3 + $0x38] sm:$0xf]
  %v71 = vld [vmem:[%s3 + $0x3c] sm:$0xf]
  %v72 = vld [vmem:[#allocation2] sm:$0x1]
  %v74 = vperm.slane %v72, 0
  %v92 = vunpack.c.l.b16 %v56
  %v93 = vunpack.c.l.b16 %v57
  %v94 = vunpack.c.l.b16 %v58
  %v95 = vunpack.c.l.b16 %v59
  %v96 = vunpack.c.l.b16 %v60
  %v97 = vunpack.c.l.b16 %v61
  %v98 = vunpack.c.l.b16 %v62
  %v99 = vunpack.c.l.b16 %v63
  %v100 = vunpack.c.l.b16 %v64
  %v101 = vunpack.c.l.b16 %v65
  %v102 = vunpack.c.l.b16 %v66
  %v103 = vunpack.c.l.b16 %v67
  %v104 = vunpack.c.l.b16 %v68
  %v105 = vunpack.c.l.b16 %v69
  %v106 = vunpack.c.l.b16 %v70
  %v107 = vunpack.c.l.b16 %v71
  %v108 = vpack.c.b16 %v93, %v92
  %v109 = vpack.c.b16 %v95, %v94
  %v110 = vpack.c.b16 %v97, %v96
  %v111 = vpack.c.b16 %v99, %v98
  %v112 = vpack.c.b16 %v101, %v100
  %v113 = vpack.c.b16 %v103, %v102
  %v114 = vpack.c.b16 %v105, %v104
  %v115 = vpack.c.b16 %v107, %v106
  %124 = vmatpush.bf16.msra.mxu0 %v115
  %125 = vmatpush.bf16.msra.mxu0 %v114
  %126 = vmatpush.bf16.msra.mxu0 %v113
  %127 = vmatpush.bf16.msra.mxu0 %v112
  %128 = vmatpush.bf16.msra.mxu0 %v111
  %129 = vmatpush.bf16.msra.mxu0 %v110
  %130 = vmatpush.bf16.msra.mxu0 %v109
  %131 = vmatpush.bf16.msra.mxu0 %v108
  %132 = vmatmul.bf16.gmra.mxu0 %v55
  %v133 = vpop.f32.mrf.mxu0
  %v134 = vadd.f32 %v74, %v133
  %v135 = vpop.f32.mrf.mxu0
  %136 = vdwg.mxu0
  %vm137 = vcmask 7168
  %138 = vst.msk [vmem:[%s5] sm:$0xff] %vm137, %v134
  // Predicated region
  $region22: #{tpu_custom_call.1} parent=0 // pred_check
    _
  $region23: #{tpu_custom_call.1} parent=0 // pred_check_branch
    %140 = sbr.rel (0) target = $region25
  $region24: #{tpu_custom_call.1} parent=0 // pred_region
    _
  $region25: #{tpu_custom_call.1} parent=0 // pred_fallthru
    _
  // Predicated region
  $region26: #{tpu_custom_call.1} parent=0 // pred_check
    _
  $region27: #{tpu_custom_call.1} parent=0 // pred_check_branch
    %142 = sbr.rel (0) target = $region29
  $region28: #{tpu_custom_call.1} parent=0 // pred_region
    _
  $region29: #{tpu_custom_call.1} parent=0 // pred_fallthru
    _

</llo_original>
